<compile_context>
chip_gen: v6e
topology: v6e:2x2x1
jax: 0.10.0
libtpu: 0.0.40
codegen_flags: <defaults>
</compile_context>

<pallas_src>
import functools

import jax
import jax.numpy as jnp
from jax.experimental import pallas as pl
from jax.experimental.pallas import tpu as pltpu


# ---------------------------------------------------------------------------
# Shared LSTM time-step (gate order matches PyTorch: i, f, g, o)
# ---------------------------------------------------------------------------
def _make_lstm_step(gx_ref, w_hh_ref, is_g_mask, H, B, hseq_ref=None):
    def step(t, carry):
        h, c = carry
        row = pl.multiple_of(t * B, B)
        # Only the recurrent matmul is left on the serial critical path.
        gates = gx_ref[pl.ds(row, B), :] + jnp.dot(
            h, w_hh_ref[...], preferred_element_type=jnp.float32
        )  # (B, 4H)
        # One activation pass over the full lane-aligned 4H axis:
        # tanh on the "g" region [2H, 3H), sigmoid elsewhere.
        acts = jnp.where(is_g_mask, jnp.tanh(gates), jax.nn.sigmoid(gates))
        i_g = acts[:, 0 * H:1 * H]
        f_g = acts[:, 1 * H:2 * H]
        g_g = acts[:, 2 * H:3 * H]
        o_g = acts[:, 3 * H:4 * H]
        c_new = f_g * c + i_g * g_g
        h_new = o_g * jnp.tanh(c_new)
        if hseq_ref is not None:
            hseq_ref[pl.ds(row, B), :] = h_new
        return h_new, c_new

    return step


def _gate_mask(B, H):
    lane = jax.lax.broadcasted_iota(jnp.int32, (B, 4 * H), 1)
    return jnp.logical_and(lane >= 2 * H, lane < 3 * H)


# ---------------------------------------------------------------------------
# Kernel A (non-final layers): fused input projection + recurrence.
#   in : x_flat [T*B, D], w_ih [D, 4H], b [1, 4H], w_hh [H, 4H]
#   out: h_flat [T*B, H]  (directly consumable as next layer's input slab)
# Single invocation (no grid): no per-timestep grid/DMA overhead.
# ---------------------------------------------------------------------------
def _lstm_layer_kernel(x_ref, w_ih_ref, b_ref, w_hh_ref, hseq_ref, gx_ref,
                       *, T, B):
    H = w_hh_ref.shape[0]
    # Batched input projection for all timesteps at once (MXU, off the
    # serial path); result stays in VMEM scratch — never touches HBM.
    gx_ref[...] = (
        jnp.dot(x_ref[...], w_ih_ref[...], preferred_element_type=jnp.float32)
        + b_ref[...]
    )
    is_g = _gate_mask(B, H)  # hoisted out of the loop
    step = _make_lstm_step(gx_ref, w_hh_ref, is_g, H, B, hseq_ref=hseq_ref)
    zeros = jnp.zeros((B, H), jnp.float32)
    jax.lax.fori_loop(0, T, step, (zeros, zeros), unroll=T <= 32)


def lstm_layer_pallas(x_flat, w_ih, b, w_hh, T, B):
    TB, D = x_flat.shape
    H = w_hh.shape[0]
    G = 4 * H
    kernel = functools.partial(_lstm_layer_kernel, T=T, B=B)
    return pl.pallas_call(
        kernel,
        out_shape=jax.ShapeDtypeStruct((TB, H), jnp.float32),
        in_specs=[
            pl.BlockSpec((TB, D), lambda: (0, 0)),
            pl.BlockSpec((D, G), lambda: (0, 0)),
            pl.BlockSpec((1, G), lambda: (0, 0)),
            pl.BlockSpec((H, G), lambda: (0, 0)),
        ],
        out_specs=pl.BlockSpec((TB, H), lambda: (0, 0)),
        scratch_shapes=[pltpu.VMEM((TB, G), jnp.float32)],
    )(x_flat, w_ih, b, w_hh)


# ---------------------------------------------------------------------------
# Kernel B (final layer): fused input projection + recurrence + Linear on the
# last timestep.  Emits only the [B, O] logits (no [T*B, H] HBM writeback and
# no extra launch for the fc).
# ---------------------------------------------------------------------------
def _lstm_last_fc_kernel(x_ref, w_ih_ref, b_ref, w_hh_ref, fc_w_ref, fc_b_ref,
                         out_ref, gx_ref, *, T, B):
    H = w_hh_ref.shape[0]
    gx_ref[...] = (
        jnp.dot(x_ref[...], w_ih_ref[...], preferred_element_type=jnp.float32)
        + b_ref[...]
    )
    is_g = _gate_mask(B, H)
    step = _make_lstm_step(gx_ref, w_hh_ref, is_g, H, B, hseq_ref=None)
    zeros = jnp.zeros((B, H), jnp.float32)
    h_last, _ = jax.lax.fori_loop(0, T, step, (zeros, zeros), unroll=T <= 32)

    out_ref[...] = (
        jnp.dot(h_last, fc_w_ref[...], preferred_element_type=jnp.float32)
        + fc_b_ref[...]
    )


def lstm_last_fc_pallas(x_flat, w_ih, b, w_hh, fc_w, fc_b, T, B):
    TB, D = x_flat.shape
    H = w_hh.shape[0]
    G = 4 * H
    O = fc_w.shape[1]
    kernel = functools.partial(_lstm_last_fc_kernel, T=T, B=B)
    return pl.pallas_call(
        kernel,
        out_shape=jax.ShapeDtypeStruct((B, O), jnp.float32),
        in_specs=[
            pl.BlockSpec((TB, D), lambda: (0, 0)),
            pl.BlockSpec((D, G), lambda: (0, 0)),
            pl.BlockSpec((1, G), lambda: (0, 0)),
            pl.BlockSpec((H, G), lambda: (0, 0)),
            pl.BlockSpec((H, O), lambda: (0, 0)),
            pl.BlockSpec((1, O), lambda: (0, 0)),
        ],
        out_specs=pl.BlockSpec((B, O), lambda: (0, 0)),
        scratch_shapes=[pltpu.VMEM((TB, G), jnp.float32)],
    )(x_flat, w_ih, b, w_hh, fc_w, fc_b)


# ---------------------------------------------------------------------------
# Full model forward
# ---------------------------------------------------------------------------
@jax.jit
def lstm_model_forward(x_ids, params):
    B, T = x_ids.shape
    # Embedding lookup directly in time-major order (only int ids transpose),
    # then flatten to the [T*B, E] slab layout used by every layer kernel.
    x_seq = jnp.take(params["embedding"], x_ids.T, axis=0)   # [T, B, E]
    x_flat = x_seq.reshape(T * B, x_seq.shape[-1])            # [T*B, E]
    # TODO(synk): the embedding gather itself stays in XLA; a scalar-prefetch
    # pl.Element gather kernel is possible but not worthwhile at these sizes.

    layers = params["lstm_layers"]
    n_layers = len(layers)
    out = None
    for li, layer in enumerate(layers):
        if li < n_layers - 1:
            x_flat = lstm_layer_pallas(
                x_flat, layer["w_ih"], layer["b"], layer["w_hh"], T, B
            )                                                 # [T*B, H]
        else:
            out = lstm_last_fc_pallas(
                x_flat, layer["w_ih"], layer["b"], layer["w_hh"],
                params["fc_w"], params["fc_b"], T, B
            )                                                 # [B, O]
    return out


def init_params(key, vocab_size, embedding_dim, hidden_dim, output_dim, num_layers):
    keys = jax.random.split(key, 3 + 4 * num_layers)
    params = {
        "embedding": jax.random.normal(
            keys[0], (vocab_size, embedding_dim), jnp.float32
        ),
        "lstm_layers": [],
    }
    bound = 1.0 / jnp.sqrt(hidden_dim)
    for i in range(num_layers):
        in_dim = embedding_dim if i == 0 else hidden_dim
        k0, k1, k2, k3 = keys[1 + 4 * i: 1 + 4 * (i + 1)]
        # stored pre-transposed: w_ih [in_dim, 4H], w_hh [H, 4H]; gate order i,f,g,o
        w_ih = jax.random.uniform(
            k0, (in_dim, 4 * hidden_dim), jnp.float32, -bound, bound
        )
        w_hh = jax.random.uniform(
            k1, (hidden_dim, 4 * hidden_dim), jnp.float32, -bound, bound
        )
        b_ih = jax.random.uniform(k2, (1, 4 * hidden_dim), jnp.float32, -bound, bound)
        b_hh = jax.random.uniform(k3, (1, 4 * hidden_dim), jnp.float32, -bound, bound)
        params["lstm_layers"].append({"w_ih": w_ih, "w_hh": w_hh, "b": b_ih + b_hh})
    kf_w, kf_b = keys[-2], keys[-1]
    fb = 1.0 / jnp.sqrt(hidden_dim)
    params["fc_w"] = jax.random.uniform(
        kf_w, (hidden_dim, output_dim), jnp.float32, -fb, fb
    )
    params["fc_b"] = jax.random.uniform(kf_b, (1, output_dim), jnp.float32, -fb, fb)
    return params


# Pure-JAX reference (same math, lax.scan recurrence) for verification.
def reference_forward(x_ids, params):
    emb = jnp.take(params["embedding"], x_ids, axis=0)      # [B, T, E]
    h_seq = jnp.transpose(emb, (1, 0, 2))                   # [T, B, E]
    for layer in params["lstm_layers"]:
        H = layer["w_hh"].shape[0]
        B = h_seq.shape[1]

        def step(carry, x_t, layer=layer, H=H):
            h, c = carry
            gates = x_t @ layer["w_ih"] + h @ layer["w_hh"] + layer["b"]
            i = jax.nn.sigmoid(gates[:, 0 * H:1 * H])
            f = jax.nn.sigmoid(gates[:, 1 * H:2 * H])
            g = jnp.tanh(gates[:, 2 * H:3 * H])
            o = jax.nn.sigmoid(gates[:, 3 * H:4 * H])
            c = f * c + i * g
            h = o * jnp.tanh(c)
            return (h, c), h

        init = (jnp.zeros((B, H), jnp.float32), jnp.zeros((B, H), jnp.float32))
        _, h_seq = jax.lax.scan(step, init, h_seq)
    return h_seq[-1] @ params["fc_w"] + params["fc_b"]


if __name__ == "__main__":
    vocab_size = 50
    embedding_dim = 16
    hidden_dim = 32
    output_dim = 4
    B, T = 2, 8

    key = jax.random.PRNGKey(0)
    k_params, k_params2, k_x = jax.random.split(key, 3)
    x_ids = jax.random.randint(k_x, (B, T), 0, vocab_size, dtype=jnp.int32)

    ok = True

    # --- num_layers = 1 (module default): exercises the fused last-layer+FC kernel
    params1 = init_params(
        k_params, vocab_size, embedding_dim, hidden_dim, output_dim, num_layers=1
    )
    out1 = jax.block_until_ready(lstm_model_forward(x_ids, params1))
    ref1 = reference_forward(x_ids, params1)
    ok &= out1.shape == (B, output_dim)
    ok &= bool(jnp.allclose(out1, ref1, rtol=1e-4, atol=1e-4))

    # --- num_layers = 2: also exercises the intermediate-layer sequence kernel
    params2 = init_params(
        k_params2, vocab_size, embedding_dim, hidden_dim, output_dim, num_layers=2
    )
    out2 = jax.block_until_ready(lstm_model_forward(x_ids, params2))
    ref2 = reference_forward(x_ids, params2)
    ok &= out2.shape == (B, output_dim)
    ok &= bool(jnp.allclose(out2, ref2, rtol=1e-4, atol=1e-4))

    assert ok, "mismatch vs pure-JAX reference"
    print("KERNEL_OK")
</pallas_src>

<mosaic_0001>
module attributes {stable_mosaic.version = 11 : i64} {
  func.func @_lstm_last_fc_kernel(%arg0: memref<16x16xf32, #tpu.memory_space<vmem>>, %arg1: memref<16x128xf32, #tpu.memory_space<vmem>>, %arg2: memref<1x128xf32, #tpu.memory_space<vmem>>, %arg3: memref<32x128xf32, #tpu.memory_space<vmem>>, %arg4: memref<32x4xf32, #tpu.memory_space<vmem>>, %arg5: memref<1x4xf32, #tpu.memory_space<vmem>>, %arg6: memref<2x4xf32, #tpu.memory_space<vmem>>, %arg7: memref<16x128xf32, #tpu.memory_space<vmem>>) attributes {dimension_semantics = [], scalar_prefetch = 0 : i64, scratch_operands = 1 : i64, tpu.core_type = #tpu.core_type<tc>} {
    %c0 = arith.constant 0 : index
    %c0_0 = arith.constant 0 : index
    %0 = vector.load %arg0[%c0, %c0_0] : memref<16x16xf32, #tpu.memory_space<vmem>>, vector<16x16xf32>
    %c0_1 = arith.constant 0 : index
    %c0_2 = arith.constant 0 : index
    %1 = vector.load %arg1[%c0_1, %c0_2] : memref<16x128xf32, #tpu.memory_space<vmem>>, vector<16x128xf32>
    %cst = arith.constant dense<0.000000e+00> : vector<16x128xf32>
    %2 = tpu.matmul %0, %1, %cst {dimension_numbers = #tpu.dot_dimension_numbers<[1], [0], [0], [1], [0, 0, 1, 1], [], []>} : vector<16x16xf32>, vector<16x128xf32>, vector<16x128xf32> -> vector<16x128xf32>
    %c0_3 = arith.constant 0 : index
    %c0_4 = arith.constant 0 : index
    %3 = vector.load %arg2[%c0_3, %c0_4] : memref<1x128xf32, #tpu.memory_space<vmem>>, vector<1x128xf32>
    %4 = vector.broadcast %3 : vector<1x128xf32> to vector<16x128xf32>
    %5 = arith.addf %2, %4 : vector<16x128xf32>
    %c0_5 = arith.constant 0 : index
    %c0_6 = arith.constant 0 : index
    %6 = vector.load %arg7[%c0_5, %c0_6] : memref<16x128xf32, #tpu.memory_space<vmem>>, vector<16x128xf32>
    tpu.vector_store %arg7[%c0_5, %c0_6], %5 {strides = array<i32>} : memref<16x128xf32, #tpu.memory_space<vmem>>, vector<16x128xf32>,
    %7 = tpu.iota {dimensions = array<i32: 1>} : vector<2x128xi32>
    %c64_i32 = arith.constant 64 : i32
    %8 = vector.broadcast %c64_i32 : i32 to vector<2x128xi32>
    %9 = arith.cmpi sge, %7, %8 : vector<2x128xi32>
    %c96_i32 = arith.constant 96 : i32
    %10 = vector.broadcast %c96_i32 : i32 to vector<2x128xi32>
    %11 = arith.cmpi slt, %7, %10 : vector<2x128xi32>
    %12 = arith.andi %9, %11 : vector<2x128xi1>
    %cst_7 = arith.constant 0.000000e+00 : f32
    %13 = vector.broadcast %cst_7 : f32 to vector<2x32xf32>
    %c0_i32 = arith.constant 0 : i32
    %c2_i32 = arith.constant 2 : i32
    %14 = arith.muli %c0_i32, %c2_i32 : i32
    %15 = tpu.assume_multiple %14, 2 : i32
    %16 = arith.index_cast %15 : i32 to index
    %c0_8 = arith.constant 0 : index
    %17 = vector.load %arg7[%16, %c0_8] : memref<16x128xf32, #tpu.memory_space<vmem>>, vector<2x128xf32>
    %c0_9 = arith.constant 0 : index
    %c0_10 = arith.constant 0 : index
    %18 = vector.load %arg3[%c0_9, %c0_10] : memref<32x128xf32, #tpu.memory_space<vmem>>, vector<32x128xf32>
    %cst_11 = arith.constant dense<0.000000e+00> : vector<2x128xf32>
    %19 = tpu.matmul %13, %18, %cst_11 {dimension_numbers = #tpu.dot_dimension_numbers<[1], [0], [0], [1], [0, 0, 1, 1], [], []>} : vector<2x32xf32>, vector<32x128xf32>, vector<2x128xf32> -> vector<2x128xf32>
    %20 = arith.addf %17, %19 : vector<2x128xf32>
    %21 = math.tanh %20 : vector<2x128xf32>
    %22 = arith.negf %20 : vector<2x128xf32>
    %23 = math.exp %22 : vector<2x128xf32>
    %cst_12 = arith.constant 1.000000e+00 : f32
    %24 = vector.broadcast %cst_12 : f32 to vector<2x128xf32>
    %25 = arith.addf %24, %23 : vector<2x128xf32>
    %26 = arith.divf %24, %25 : vector<2x128xf32>
    %27 = arith.select %12, %21, %26 : vector<2x128xi1>, vector<2x128xf32>
    %28 = vector.extract_strided_slice %27 {offsets = [0, 0], sizes = [2, 32], strides = [1, 1]} : vector<2x128xf32> to vector<2x32xf32>
    %29 = vector.extract_strided_slice %27 {offsets = [0, 32], sizes = [2, 32], strides = [1, 1]} : vector<2x128xf32> to vector<2x32xf32>
    %30 = vector.extract_strided_slice %27 {offsets = [0, 64], sizes = [2, 32], strides = [1, 1]} : vector<2x128xf32> to vector<2x32xf32>
    %31 = vector.extract_strided_slice %27 {offsets = [0, 96], sizes = [2, 32], strides = [1, 1]} : vector<2x128xf32> to vector<2x32xf32>
    %32 = arith.mulf %29, %13 : vector<2x32xf32>
    %33 = arith.mulf %28, %30 : vector<2x32xf32>
    %34 = arith.addf %32, %33 : vector<2x32xf32>
    %35 = math.tanh %34 : vector<2x32xf32>
    %36 = arith.mulf %31, %35 : vector<2x32xf32>
    %c1_i32 = arith.constant 1 : i32
    %c2_i32_13 = arith.constant 2 : i32
    %37 = arith.muli %c1_i32, %c2_i32_13 : i32
    %38 = tpu.assume_multiple %37, 2 : i32
    %39 = arith.index_cast %38 : i32 to index
    %c0_14 = arith.constant 0 : index
    %40 = vector.load %arg7[%39, %c0_14] : memref<16x128xf32, #tpu.memory_space<vmem>>, vector<2x128xf32>
    %c0_15 = arith.constant 0 : index
    %c0_16 = arith.constant 0 : index
    %41 = vector.load %arg3[%c0_15, %c0_16] : memref<32x128xf32, #tpu.memory_space<vmem>>, vector<32x128xf32>
    %cst_17 = arith.constant dense<0.000000e+00> : vector<2x128xf32>
    %42 = tpu.matmul %36, %41, %cst_17 {dimension_numbers = #tpu.dot_dimension_numbers<[1], [0], [0], [1], [0, 0, 1, 1], [], []>} : vector<2x32xf32>, vector<32x128xf32>, vector<2x128xf32> -> vector<2x128xf32>
    %43 = arith.addf %40, %42 : vector<2x128xf32>
    %44 = math.tanh %43 : vector<2x128xf32>
    %45 = arith.negf %43 : vector<2x128xf32>
    %46 = math.exp %45 : vector<2x128xf32>
    %cst_18 = arith.constant 1.000000e+00 : f32
    %47 = vector.broadcast %cst_18 : f32 to vector<2x128xf32>
    %48 = arith.addf %47, %46 : vector<2x128xf32>
    %49 = arith.divf %47, %48 : vector<2x128xf32>
    %50 = arith.select %12, %44, %49 : vector<2x128xi1>, vector<2x128xf32>
    %51 = vector.extract_strided_slice %50 {offsets = [0, 0], sizes = [2, 32], strides = [1, 1]} : vector<2x128xf32> to vector<2x32xf32>
    %52 = vector.extract_strided_slice %50 {offsets = [0, 32], sizes = [2, 32], strides = [1, 1]} : vector<2x128xf32> to vector<2x32xf32>
    %53 = vector.extract_strided_slice %50 {offsets = [0, 64], sizes = [2, 32], strides = [1, 1]} : vector<2x128xf32> to vector<2x32xf32>
    %54 = vector.extract_strided_slice %50 {offsets = [0, 96], sizes = [2, 32], strides = [1, 1]} : vector<2x128xf32> to vector<2x32xf32>
    %55 = arith.mulf %52, %34 : vector<2x32xf32>
    %56 = arith.mulf %51, %53 : vector<2x32xf32>
    %57 = arith.addf %55, %56 : vector<2x32xf32>
    %58 = math.tanh %57 : vector<2x32xf32>
    %59 = arith.mulf %54, %58 : vector<2x32xf32>
    %c2_i32_19 = arith.constant 2 : i32
    %c2_i32_20 = arith.constant 2 : i32
    %60 = arith.muli %c2_i32_19, %c2_i32_20 : i32
    %61 = tpu.assume_multiple %60, 2 : i32
    %62 = arith.index_cast %61 : i32 to index
    %c0_21 = arith.constant 0 : index
    %63 = vector.load %arg7[%62, %c0_21] : memref<16x128xf32, #tpu.memory_space<vmem>>, vector<2x128xf32>
    %c0_22 = arith.constant 0 : index
    %c0_23 = arith.constant 0 : index
    %64 = vector.load %arg3[%c0_22, %c0_23] : memref<32x128xf32, #tpu.memory_space<vmem>>, vector<32x128xf32>
    %cst_24 = arith.constant dense<0.000000e+00> : vector<2x128xf32>
    %65 = tpu.matmul %59, %64, %cst_24 {dimension_numbers = #tpu.dot_dimension_numbers<[1], [0], [0], [1], [0, 0, 1, 1], [], []>} : vector<2x32xf32>, vector<32x128xf32>, vector<2x128xf32> -> vector<2x128xf32>
    %66 = arith.addf %63, %65 : vector<2x128xf32>
    %67 = math.tanh %66 : vector<2x128xf32>
    %68 = arith.negf %66 : vector<2x128xf32>
    %69 = math.exp %68 : vector<2x128xf32>
    %cst_25 = arith.constant 1.000000e+00 : f32
    %70 = vector.broadcast %cst_25 : f32 to vector<2x128xf32>
    %71 = arith.addf %70, %69 : vector<2x128xf32>
    %72 = arith.divf %70, %71 : vector<2x128xf32>
    %73 = arith.select %12, %67, %72 : vector<2x128xi1>, vector<2x128xf32>
    %74 = vector.extract_strided_slice %73 {offsets = [0, 0], sizes = [2, 32], strides = [1, 1]} : vector<2x128xf32> to vector<2x32xf32>
    %75 = vector.extract_strided_slice %73 {offsets = [0, 32], sizes = [2, 32], strides = [1, 1]} : vector<2x128xf32> to vector<2x32xf32>
    %76 = vector.extract_strided_slice %73 {offsets = [0, 64], sizes = [2, 32], strides = [1, 1]} : vector<2x128xf32> to vector<2x32xf32>
    %77 = vector.extract_strided_slice %73 {offsets = [0, 96], sizes = [2, 32], strides = [1, 1]} : vector<2x128xf32> to vector<2x32xf32>
    %78 = arith.mulf %75, %57 : vector<2x32xf32>
    %79 = arith.mulf %74, %76 : vector<2x32xf32>
    %80 = arith.addf %78, %79 : vector<2x32xf32>
    %81 = math.tanh %80 : vector<2x32xf32>
    %82 = arith.mulf %77, %81 : vector<2x32xf32>
    %c3_i32 = arith.constant 3 : i32
    %c2_i32_26 = arith.constant 2 : i32
    %83 = arith.muli %c3_i32, %c2_i32_26 : i32
    %84 = tpu.assume_multiple %83, 2 : i32
    %85 = arith.index_cast %84 : i32 to index
    %c0_27 = arith.constant 0 : index
    %86 = vector.load %arg7[%85, %c0_27] : memref<16x128xf32, #tpu.memory_space<vmem>>, vector<2x128xf32>
    %c0_28 = arith.constant 0 : index
    %c0_29 = arith.constant 0 : index
    %87 = vector.load %arg3[%c0_28, %c0_29] : memref<32x128xf32, #tpu.memory_space<vmem>>, vector<32x128xf32>
    %cst_30 = arith.constant dense<0.000000e+00> : vector<2x128xf32>
    %88 = tpu.matmul %82, %87, %cst_30 {dimension_numbers = #tpu.dot_dimension_numbers<[1], [0], [0], [1], [0, 0, 1, 1], [], []>} : vector<2x32xf32>, vector<32x128xf32>, vector<2x128xf32> -> vector<2x128xf32>
    %89 = arith.addf %86, %88 : vector<2x128xf32>
    %90 = math.tanh %89 : vector<2x128xf32>
    %91 = arith.negf %89 : vector<2x128xf32>
    %92 = math.exp %91 : vector<2x128xf32>
    %cst_31 = arith.constant 1.000000e+00 : f32
    %93 = vector.broadcast %cst_31 : f32 to vector<2x128xf32>
    %94 = arith.addf %93, %92 : vector<2x128xf32>
    %95 = arith.divf %93, %94 : vector<2x128xf32>
    %96 = arith.select %12, %90, %95 : vector<2x128xi1>, vector<2x128xf32>
    %97 = vector.extract_strided_slice %96 {offsets = [0, 0], sizes = [2, 32], strides = [1, 1]} : vector<2x128xf32> to vector<2x32xf32>
    %98 = vector.extract_strided_slice %96 {offsets = [0, 32], sizes = [2, 32], strides = [1, 1]} : vector<2x128xf32> to vector<2x32xf32>
    %99 = vector.extract_strided_slice %96 {offsets = [0, 64], sizes = [2, 32], strides = [1, 1]} : vector<2x128xf32> to vector<2x32xf32>
    %100 = vector.extract_strided_slice %96 {offsets = [0, 96], sizes = [2, 32], strides = [1, 1]} : vector<2x128xf32> to vector<2x32xf32>
    %101 = arith.mulf %98, %80 : vector<2x32xf32>
    %102 = arith.mulf %97, %99 : vector<2x32xf32>
    %103 = arith.addf %101, %102 : vector<2x32xf32>
    %104 = math.tanh %103 : vector<2x32xf32>
    %105 = arith.mulf %100, %104 : vector<2x32xf32>
    %c4_i32 = arith.constant 4 : i32
    %c2_i32_32 = arith.constant 2 : i32
    %106 = arith.muli %c4_i32, %c2_i32_32 : i32
    %107 = tpu.assume_multiple %106, 2 : i32
    %108 = arith.index_cast %107 : i32 to index
    %c0_33 = arith.constant 0 : index
    %109 = vector.load %arg7[%108, %c0_33] : memref<16x128xf32, #tpu.memory_space<vmem>>, vector<2x128xf32>
    %c0_34 = arith.constant 0 : index
    %c0_35 = arith.constant 0 : index
    %110 = vector.load %arg3[%c0_34, %c0_35] : memref<32x128xf32, #tpu.memory_space<vmem>>, vector<32x128xf32>
    %cst_36 = arith.constant dense<0.000000e+00> : vector<2x128xf32>
    %111 = tpu.matmul %105, %110, %cst_36 {dimension_numbers = #tpu.dot_dimension_numbers<[1], [0], [0], [1], [0, 0, 1, 1], [], []>} : vector<2x32xf32>, vector<32x128xf32>, vector<2x128xf32> -> vector<2x128xf32>
    %112 = arith.addf %109, %111 : vector<2x128xf32>
    %113 = math.tanh %112 : vector<2x128xf32>
    %114 = arith.negf %112 : vector<2x128xf32>
    %115 = math.exp %114 : vector<2x128xf32>
    %cst_37 = arith.constant 1.000000e+00 : f32
    %116 = vector.broadcast %cst_37 : f32 to vector<2x128xf32>
    %117 = arith.addf %116, %115 : vector<2x128xf32>
    %118 = arith.divf %116, %117 : vector<2x128xf32>
    %119 = arith.select %12, %113, %118 : vector<2x128xi1>, vector<2x128xf32>
    %120 = vector.extract_strided_slice %119 {offsets = [0, 0], sizes = [2, 32], strides = [1, 1]} : vector<2x128xf32> to vector<2x32xf32>
    %121 = vector.extract_strided_slice %119 {offsets = [0, 32], sizes = [2, 32], strides = [1, 1]} : vector<2x128xf32> to vector<2x32xf32>
    %122 = vector.extract_strided_slice %119 {offsets = [0, 64], sizes = [2, 32], strides = [1, 1]} : vector<2x128xf32> to vector<2x32xf32>
    %123 = vector.extract_strided_slice %119 {offsets = [0, 96], sizes = [2, 32], strides = [1, 1]} : vector<2x128xf32> to vector<2x32xf32>
    %124 = arith.mulf %121, %103 : vector<2x32xf32>
    %125 = arith.mulf %120, %122 : vector<2x32xf32>
    %126 = arith.addf %124, %125 : vector<2x32xf32>
    %127 = math.tanh %126 : vector<2x32xf32>
    %128 = arith.mulf %123, %127 : vector<2x32xf32>
    %c5_i32 = arith.constant 5 : i32
    %c2_i32_38 = arith.constant 2 : i32
    %129 = arith.muli %c5_i32, %c2_i32_38 : i32
    %130 = tpu.assume_multiple %129, 2 : i32
    %131 = arith.index_cast %130 : i32 to index
    %c0_39 = arith.constant 0 : index
    %132 = vector.load %arg7[%131, %c0_39] : memref<16x128xf32, #tpu.memory_space<vmem>>, vector<2x128xf32>
    %c0_40 = arith.constant 0 : index
    %c0_41 = arith.constant 0 : index
    %133 = vector.load %arg3[%c0_40, %c0_41] : memref<32x128xf32, #tpu.memory_space<vmem>>, vector<32x128xf32>
    %cst_42 = arith.constant dense<0.000000e+00> : vector<2x128xf32>
    %134 = tpu.matmul %128, %133, %cst_42 {dimension_numbers = #tpu.dot_dimension_numbers<[1], [0], [0], [1], [0, 0, 1, 1], [], []>} : vector<2x32xf32>, vector<32x128xf32>, vector<2x128xf32> -> vector<2x128xf32>
    %135 = arith.addf %132, %134 : vector<2x128xf32>
    %136 = math.tanh %135 : vector<2x128xf32>
    %137 = arith.negf %135 : vector<2x128xf32>
    %138 = math.exp %137 : vector<2x128xf32>
    %cst_43 = arith.constant 1.000000e+00 : f32
    %139 = vector.broadcast %cst_43 : f32 to vector<2x128xf32>
    %140 = arith.addf %139, %138 : vector<2x128xf32>
    %141 = arith.divf %139, %140 : vector<2x128xf32>
    %142 = arith.select %12, %136, %141 : vector<2x128xi1>, vector<2x128xf32>
    %143 = vector.extract_strided_slice %142 {offsets = [0, 0], sizes = [2, 32], strides = [1, 1]} : vector<2x128xf32> to vector<2x32xf32>
    %144 = vector.extract_strided_slice %142 {offsets = [0, 32], sizes = [2, 32], strides = [1, 1]} : vector<2x128xf32> to vector<2x32xf32>
    %145 = vector.extract_strided_slice %142 {offsets = [0, 64], sizes = [2, 32], strides = [1, 1]} : vector<2x128xf32> to vector<2x32xf32>
    %146 = vector.extract_strided_slice %142 {offsets = [0, 96], sizes = [2, 32], strides = [1, 1]} : vector<2x128xf32> to vector<2x32xf32>
    %147 = arith.mulf %144, %126 : vector<2x32xf32>
    %148 = arith.mulf %143, %145 : vector<2x32xf32>
    %149 = arith.addf %147, %148 : vector<2x32xf32>
    %150 = math.tanh %149 : vector<2x32xf32>
    %151 = arith.mulf %146, %150 : vector<2x32xf32>
    %c6_i32 = arith.constant 6 : i32
    %c2_i32_44 = arith.constant 2 : i32
    %152 = arith.muli %c6_i32, %c2_i32_44 : i32
    %153 = tpu.assume_multiple %152, 2 : i32
    %154 = arith.index_cast %153 : i32 to index
    %c0_45 = arith.constant 0 : index
    %155 = vector.load %arg7[%154, %c0_45] : memref<16x128xf32, #tpu.memory_space<vmem>>, vector<2x128xf32>
    %c0_46 = arith.constant 0 : index
    %c0_47 = arith.constant 0 : index
    %156 = vector.load %arg3[%c0_46, %c0_47] : memref<32x128xf32, #tpu.memory_space<vmem>>, vector<32x128xf32>
    %cst_48 = arith.constant dense<0.000000e+00> : vector<2x128xf32>
    %157 = tpu.matmul %151, %156, %cst_48 {dimension_numbers = #tpu.dot_dimension_numbers<[1], [0], [0], [1], [0, 0, 1, 1], [], []>} : vector<2x32xf32>, vector<32x128xf32>, vector<2x128xf32> -> vector<2x128xf32>
    %158 = arith.addf %155, %157 : vector<2x128xf32>
    %159 = math.tanh %158 : vector<2x128xf32>
    %160 = arith.negf %158 : vector<2x128xf32>
    %161 = math.exp %160 : vector<2x128xf32>
    %cst_49 = arith.constant 1.000000e+00 : f32
    %162 = vector.broadcast %cst_49 : f32 to vector<2x128xf32>
    %163 = arith.addf %162, %161 : vector<2x128xf32>
    %164 = arith.divf %162, %163 : vector<2x128xf32>
    %165 = arith.select %12, %159, %164 : vector<2x128xi1>, vector<2x128xf32>
    %166 = vector.extract_strided_slice %165 {offsets = [0, 0], sizes = [2, 32], strides = [1, 1]} : vector<2x128xf32> to vector<2x32xf32>
    %167 = vector.extract_strided_slice %165 {offsets = [0, 32], sizes = [2, 32], strides = [1, 1]} : vector<2x128xf32> to vector<2x32xf32>
    %168 = vector.extract_strided_slice %165 {offsets = [0, 64], sizes = [2, 32], strides = [1, 1]} : vector<2x128xf32> to vector<2x32xf32>
    %169 = vector.extract_strided_slice %165 {offsets = [0, 96], sizes = [2, 32], strides = [1, 1]} : vector<2x128xf32> to vector<2x32xf32>
    %170 = arith.mulf %167, %149 : vector<2x32xf32>
    %171 = arith.mulf %166, %168 : vector<2x32xf32>
    %172 = arith.addf %170, %171 : vector<2x32xf32>
    %173 = math.tanh %172 : vector<2x32xf32>
    %174 = arith.mulf %169, %173 : vector<2x32xf32>
    %c7_i32 = arith.constant 7 : i32
    %c2_i32_50 = arith.constant 2 : i32
    %175 = arith.muli %c7_i32, %c2_i32_50 : i32
    %176 = tpu.assume_multiple %175, 2 : i32
    %177 = arith.index_cast %176 : i32 to index
    %c0_51 = arith.constant 0 : index
    %178 = vector.load %arg7[%177, %c0_51] : memref<16x128xf32, #tpu.memory_space<vmem>>, vector<2x128xf32>
    %c0_52 = arith.constant 0 : index
    %c0_53 = arith.constant 0 : index
    %179 = vector.load %arg3[%c0_52, %c0_53] : memref<32x128xf32, #tpu.memory_space<vmem>>, vector<32x128xf32>
    %cst_54 = arith.constant dense<0.000000e+00> : vector<2x128xf32>
    %180 = tpu.matmul %174, %179, %cst_54 {dimension_numbers = #tpu.dot_dimension_numbers<[1], [0], [0], [1], [0, 0, 1, 1], [], []>} : vector<2x32xf32>, vector<32x128xf32>, vector<2x128xf32> -> vector<2x128xf32>
    %181 = arith.addf %178, %180 : vector<2x128xf32>
    %182 = math.tanh %181 : vector<2x128xf32>
    %183 = arith.negf %181 : vector<2x128xf32>
    %184 = math.exp %183 : vector<2x128xf32>
    %cst_55 = arith.constant 1.000000e+00 : f32
    %185 = vector.broadcast %cst_55 : f32 to vector<2x128xf32>
    %186 = arith.addf %185, %184 : vector<2x128xf32>
    %187 = arith.divf %185, %186 : vector<2x128xf32>
    %188 = arith.select %12, %182, %187 : vector<2x128xi1>, vector<2x128xf32>
    %189 = vector.extract_strided_slice %188 {offsets = [0, 0], sizes = [2, 32], strides = [1, 1]} : vector<2x128xf32> to vector<2x32xf32>
    %190 = vector.extract_strided_slice %188 {offsets = [0, 32], sizes = [2, 32], strides = [1, 1]} : vector<2x128xf32> to vector<2x32xf32>
    %191 = vector.extract_strided_slice %188 {offsets = [0, 64], sizes = [2, 32], strides = [1, 1]} : vector<2x128xf32> to vector<2x32xf32>
    %192 = vector.extract_strided_slice %188 {offsets = [0, 96], sizes = [2, 32], strides = [1, 1]} : vector<2x128xf32> to vector<2x32xf32>
    %193 = arith.mulf %190, %172 : vector<2x32xf32>
    %194 = arith.mulf %189, %191 : vector<2x32xf32>
    %195 = arith.addf %193, %194 : vector<2x32xf32>
    %196 = math.tanh %195 : vector<2x32xf32>
    %197 = arith.mulf %192, %196 : vector<2x32xf32>
    %c8_i32 = arith.constant 8 : i32
    %c0_56 = arith.constant 0 : index
    %c0_57 = arith.constant 0 : index
    %198 = vector.load %arg4[%c0_56, %c0_57] : memref<32x4xf32, #tpu.memory_space<vmem>>, vector<32x4xf32>
    %cst_58 = arith.constant dense<0.000000e+00> : vector<2x4xf32>
    %199 = tpu.matmul %197, %198, %cst_58 {dimension_numbers = #tpu.dot_dimension_numbers<[1], [0], [0], [1], [0, 0, 1, 1], [], []>} : vector<2x32xf32>, vector<32x4xf32>, vector<2x4xf32> -> vector<2x4xf32>
    %c0_59 = arith.constant 0 : index
    %c0_60 = arith.constant 0 : index
    %200 = vector.load %arg5[%c0_59, %c0_60] : memref<1x4xf32, #tpu.memory_space<vmem>>, vector<1x4xf32>
    %201 = vector.broadcast %200 : vector<1x4xf32> to vector<2x4xf32>
    %202 = arith.addf %199, %201 : vector<2x4xf32>
    %c0_61 = arith.constant 0 : index
    %c0_62 = arith.constant 0 : index
    %203 = vector.load %arg6[%c0_61, %c0_62] : memref<2x4xf32, #tpu.memory_space<vmem>>, vector<2x4xf32>
    tpu.vector_store %arg6[%c0_61, %c0_62], %202 {strides = array<i32>} : memref<2x4xf32, #tpu.memory_space<vmem>>, vector<2x4xf32>,
    return
  }
}

</mosaic_0001>

<llo_original>
// kernel: lstm_model_forward.1
$region0: #{lstm_model_forward.1}
  #allocation0 [shape = 'u32[]', space=smem, size = 0x4, offset = 0x4, fixed_abs, tag = 'smem constant byte address 0x4 - core index']
  #allocation1 [shape = 'u32[144,128]{1,0:T(1,128)}', space=vmem, size = 0x12000, scoped, tag = 'internal scratch']
  #allocation2 [shape = 'f32[16,128]{1,0:T(8,128)}', space=vmem, size = 0x2000, scoped, tag = 'scratch operand']
  %s0 = inlined_call_operand.vmem [shape: f32[16,16], index: 0, kind: input, shape index: {}]
  %s1 = inlined_call_operand.vmem [shape: f32[16,128], index: 1, kind: input, shape index: {}]
  %s2 = inlined_call_operand.vmem [shape: f32[1,128], index: 2, kind: input, shape index: {}]
  %s3 = inlined_call_operand.vmem [shape: f32[32,128], index: 3, kind: input, shape index: {}]
  %s4 = inlined_call_operand.vmem [shape: f32[32,4], index: 4, kind: input, shape index: {}]
  %s5 = inlined_call_operand.vmem [shape: f32[1,4], index: 5, kind: input, shape index: {}]
  %s6 = inlined_call_operand.hbm [shape: f32[2,4], index: 6, kind: output, shape index: {}]
  %s7 = sld [smem:[#allocation0]]
  $region34: #{lstm_model_forward.1} parent=0
    _
  %s9 = ssub.s32 1, %s7
  %s10 = scalar_select 0, %s9, %s7
  $region1: #{lstm_model_forward.1} parent=0
    #allocation3 [shape = 'u8[1024]{0}', space=vmem, size = 0x400, scoped, tag = 'output window, operand 0, single buffered']
    #allocation4 [shape = 's32[1]{0}', space=sflag, size = 0x4, scoped, tag = 'scoped memory for lstm_model_forward.1']
    %11 = vsyncpa [#allocation4], 0
    // Predicated region
    $region2: #{lstm_model_forward.1} parent=1 // pred_check
      _
    $region3: #{lstm_model_forward.1} parent=1 // pred_check_branch
      %13 = sbr.rel (0) target = $region5
    $region4: #{lstm_model_forward.1} parent=1 // pred_region
      _
    $region5: #{lstm_model_forward.1} parent=1 // pred_fallthru
      _
    // Predicated region
    $region6: #{lstm_model_forward.1} parent=1 // pred_check
      _
    $region7: #{lstm_model_forward.1} parent=1 // pred_check_branch
      %15 = sbr.rel (0) target = $region9
    $region8: #{lstm_model_forward.1} parent=1 // pred_region
      _
    $region9: #{lstm_model_forward.1} parent=1 // pred_fallthru
      _
    // Predicated region
    $region10: #{lstm_model_forward.1} parent=1 // pred_check
      _
    $region11: #{lstm_model_forward.1} parent=1 // pred_check_branch
      %17 = sbr.rel (0) target = $region13
    $region12: #{lstm_model_forward.1} parent=1 // pred_region
      _
    $region13: #{lstm_model_forward.1} parent=1 // pred_fallthru
      _
    // Predicated region
    $region14: #{lstm_model_forward.1} parent=1 // pred_check
      _
    $region15: #{lstm_model_forward.1} parent=1 // pred_check_branch
      %19 = sbr.rel (0) target = $region17
    $region16: #{lstm_model_forward.1} parent=1 // pred_region
      _
    $region17: #{lstm_model_forward.1} parent=1 // pred_fallthru
      _
    // Predicated region
    $region18: #{lstm_model_forward.1} parent=1 // pred_check
      _
    $region19: #{lstm_model_forward.1} parent=1 // pred_check_branch
      %21 = sbr.rel (0) target = $region21
    $region20: #{lstm_model_forward.1} parent=1 // pred_region
      _
    $region21: #{lstm_model_forward.1} parent=1 // pred_fallthru
      _
    // Predicated region
    $region22: #{lstm_model_forward.1} parent=1 // pred_check
      _
    $region23: #{lstm_model_forward.1} parent=1 // pred_check_branch
      %23 = sbr.rel (0) target = $region25
    $region24: #{lstm_model_forward.1} parent=1 // pred_region
      _
    $region25: #{lstm_model_forward.1} parent=1 // pred_fallthru
      _
    %v24 = vld [vmem:[%s0] sm:$0xff]
    %v25 = vld [vmem:[%s0 + $0x8] sm:$0xff]
    %v26 = vld [vmem:[%s1] sm:$0xff]
    %v27 = vld [vmem:[%s1 + $0x8] sm:$0xff]
    %v28 = vld [vmem:[%s2] sm:$0x1]
    %v30 = vlaneseq
    %v31 = vshrl.u32 %v30, 7
    %v32 = vsub.s32 0, %v31
    %v33 = vrot.slane %v28, %v32
    %vm35 = vcmask 130048
    %v37 = vsel %vm35, %v24, 0
    %v40 = vsel %vm35, %v25, 0
    %42 = vmatprep.subr.mxu0 0.0
    %43 = vmatpush1.msra.mxu0 0.0
    %44 = vmatprep.subr.mxu0 0.0
    %45 = vmatpush1.msra.mxu0 0.0
    %46 = vmatprep.subr.mxu0 0.0
    %47 = vmatpush1.msra.mxu0 0.0
    %48 = vmatprep.subr.mxu0 0.0
    %49 = vmatpush1.msra.mxu0 0.0
    %50 = vmatprep.subr.mxu0 0.0
    %51 = vmatpush1.msra.mxu0 0.0
    %52 = vmatprep.subr.mxu0 0.0
    %53 = vmatpush1.msra.mxu0 0.0
    %54 = vmatprep.subr.mxu0 0.0
    %55 = vmatpush1.msra.mxu0 0.0
    %56 = vmatprep.subr.mxu0 0.0
    %57 = vmatpush1.msra.mxu0 0.0
    %58 = vmatprep.subr.mxu0 0.0
    %59 = vmatpush1.msra.mxu0 0.0
    %60 = vmatprep.subr.mxu0 0.0
    %61 = vmatpush1.msra.mxu0 0.0
    %62 = vmatprep.subr.mxu0 0.0
    %63 = vmatpush1.msra.mxu0 0.0
    %64 = vmatprep.subr.mxu0 0.0
    %65 = vmatpush1.msra.mxu0 0.0
    %66 = vmatprep.subr.mxu0 0.0
    %67 = vmatpush1.msra.mxu0 0.0
    %68 = vmatprep.subr.mxu0 0.0
    %69 = vmatpush1.msra.mxu0 0.0
    %70 = vmatprep.subr.mxu0 0.0
    %71 = vmatpush1.msra.mxu0 %v27
    %72 = vmatprep.subr.mxu0 0.0
    %73 = vmatpush1.msra.mxu0 %v26
    %74 = vmatprep.subr.mxu0 0.0
    %75 = vmatpush2.msra.mxu0 0.0
    %76 = vmatprep.subr.mxu0 0.0
    %77 = vmatpush2.msra.mxu0 0.0
    %78 = vmatprep.subr.mxu0 0.0
    %79 = vmatpush2.msra.mxu0 0.0
    %80 = vmatprep.subr.mxu0 0.0
    %81 = vmatpush2.msra.mxu0 0.0
    %82 = vmatprep.subr.mxu0 0.0
    %83 = vmatpush2.msra.mxu0 0.0
    %84 = vmatprep.subr.mxu0 0.0
    %85 = vmatpush2.msra.mxu0 0.0
    %86 = vmatprep.subr.mxu0 0.0
    %87 = vmatpush2.msra.mxu0 0.0
    %88 = vmatprep.subr.mxu0 0.0
    %89 = vmatpush2.msra.mxu0 0.0
    %90 = vmatprep.subr.mxu0 0.0
    %91 = vmatpush2.msra.mxu0 0.0
    %92 = vmatprep.subr.mxu0 0.0
    %93 = vmatpush2.msra.mxu0 0.0
    %94 = vmatprep.subr.mxu0 0.0
    %95 = vmatpush2.msra.mxu0 0.0
    %96 = vmatprep.subr.mxu0 0.0
    %97 = vmatpush2.msra.mxu0 0.0
    %98 = vmatprep.subr.mxu0 0.0
    %99 = vmatpush2.msra.mxu0 0.0
    %100 = vmatprep.subr.mxu0 0.0
    %101 = vmatpush2.msra.mxu0 0.0
    %102 = vmatprep.subr.mxu0 0.0
    %103 = vmatpush2.msra.mxu0 0.0
    %104 = vmatprep.subr.mxu0 0.0
    %105 = vmatpush2.msra.mxu0 0.0
    %106 = vmatprep.mubr.f32.mxu0 0.0
    %107 = vmatmul.mubr.f32.gmra.mxu0 %v37
    %v108 = vpop.f32.mrf.mxu0
    %v109 = vadd.f32 %v33, %v108
    %v110 = vpop.f32.mrf.mxu0
    %111 = vmatprep.mubr.f32.mxu0 0.0
    %112 = vmatmul.mubr.f32.gmra.mxu0 %v40
    %v113 = vpop.f32.mrf.mxu0
    %v114 = vadd.f32 %v33, %v113
    %v115 = vpop.f32.mrf.mxu0
    %116 = vdwg.mxu0
    %117 = vst [vmem:[#allocation2] sm:$0xff] %v109
    %118 = vst [vmem:[#allocation2 + $0x8] sm:$0xff] %v114
    %v119 = vlaneseq
    %v120 = vand.u32 %v119, 127
    %vm121 = vcmp.ge.s32.totalorder %v120, 64
    %vm122 = vcmp.lt.s32.totalorder %v120, 96
    %vm123 = vmand %vm121, %vm122
    %v124 = vld [vmem:[#allocation2] sm:$0x3]
    %v125 = vld [vmem:[%s3] sm:$0xff]
    %v126 = vld [vmem:[%s3 + $0x8] sm:$0xff]
    %v127 = vld [vmem:[%s3 + $0x10] sm:$0xff]
    %v128 = vld [vmem:[%s3 + $0x18] sm:$0xff]
    %vm129 = vcmask 261120
    %v131 = vsel %vm129, 0.0, 0
    %133 = vmatprep.subr.mxu0 0.0
    %134 = vmatpush1.msra.mxu0 0.0
    %135 = vmatprep.subr.mxu0 0.0
    %136 = vmatpush1.msra.mxu0 0.0
    %137 = vmatprep.subr.mxu0 0.0
    %138 = vmatpush1.msra.mxu0 0.0
    %139 = vmatprep.subr.mxu0 0.0
    %140 = vmatpush1.msra.mxu0 0.0
    %141 = vmatprep.subr.mxu0 0.0
    %142 = vmatpush1.msra.mxu0 0.0
    %143 = vmatprep.subr.mxu0 0.0
    %144 = vmatpush1.msra.mxu0 0.0
    %145 = vmatprep.subr.mxu0 0.0
    %146 = vmatpush1.msra.mxu0 0.0
    %147 = vmatprep.subr.mxu0 0.0
    %148 = vmatpush1.msra.mxu0 0.0
    %149 = vmatprep.subr.mxu0 0.0
    %150 = vmatpush1.msra.mxu0 0.0
    %151 = vmatprep.subr.mxu0 0.0
    %152 = vmatpush1.msra.mxu0 0.0
    %153 = vmatprep.subr.mxu0 0.0
    %154 = vmatpush1.msra.mxu0 0.0
    %155 = vmatprep.subr.mxu0 0.0
    %156 = vmatpush1.msra.mxu0 0.0
    %157 = vmatprep.subr.mxu0 0.0
    %158 = vmatpush1.msra.mxu0 %v128
    %159 = vmatprep.subr.mxu0 0.0
    %160 = vmatpush1.msra.mxu0 %v127
    %161 = vmatprep.subr.mxu0 0.0
    %162 = vmatpush1.msra.mxu0 %v126
    %163 = vmatprep.subr.mxu0 0.0
    %164 = vmatpush1.msra.mxu0 %v125
    %165 = vmatprep.subr.mxu0 0.0
    %166 = vmatpush2.msra.mxu0 0.0
    %167 = vmatprep.subr.mxu0 0.0
    %168 = vmatpush2.msra.mxu0 0.0
    %169 = vmatprep.subr.mxu0 0.0
    %170 = vmatpush2.msra.mxu0 0.0
    %171 = vmatprep.subr.mxu0 0.0
    %172 = vmatpush2.msra.mxu0 0.0
    %173 = vmatprep.subr.mxu0 0.0
    %174 = vmatpush2.msra.mxu0 0.0
    %175 = vmatprep.subr.mxu0 0.0
    %176 = vmatpush2.msra.mxu0 0.0
    %177 = vmatprep.subr.mxu0 0.0
    %178 = vmatpush2.msra.mxu0 0.0
    %179 = vmatprep.subr.mxu0 0.0
    %180 = vmatpush2.msra.mxu0 0.0
    %181 = vmatprep.subr.mxu0 0.0
    %182 = vmatpush2.msra.mxu0 0.0
    %183 = vmatprep.subr.mxu0 0.0
    %184 = vmatpush2.msra.mxu0 0.0
    %185 = vmatprep.subr.mxu0 0.0
    %186 = vmatpush2.msra.mxu0 0.0
    %187 = vmatprep.subr.mxu0 0.0
    %188 = vmatpush2.msra.mxu0 0.0
    %189 = vmatprep.subr.mxu0 0.0
    %190 = vmatpush2.msra.mxu0 0.0
    %191 = vmatprep.subr.mxu0 0.0
    %192 = vmatpush2.msra.mxu0 0.0
    %193 = vmatprep.subr.mxu0 0.0
    %194 = vmatpush2.msra.mxu0 0.0
    %195 = vmatprep.subr.mxu0 0.0
    %196 = vmatpush2.msra.mxu0 0.0
    %197 = vmatprep.mubr.f32.mxu0 0.0
    %198 = vmatmul.mubr.f32.gmra.mxu0 %v131
    %v199 = vpop.f32.mrf.mxu0
    %v200 = vadd.f32 0.0, %v199
    %v201 = vpop.f32.mrf.mxu0
    %202 = vdwg.mxu0
    %v203 = vadd.f32 %v124, %v200
    %v204 = vtanh.pop %v203
    %v205 = vxor.u32 %v203, 2147483648
    %v206 = vmul.f32 %v205, 1.442695
    %v207 = vpow.pop %v206
    %v208 = vadd.f32 %v207, 1.0
    %v209 = vrcp.pop %v208
    %v210 = vmul.f32 1.0, %v209
    %v211 = vsel %vm123, %v204, %v210
    %v212 = vmul.f32 %v211, 0.0
    %214 = vrot.lane.b32.xlu0 %v211, 64
    %v215 = vpop.permute.xlu0 %214
    %v217 = vmul.f32 %v211, %v215
    %219 = vrot.lane.b32.xlu0 %v217, 32
    %v220 = vpop.permute.xlu0 %219
    %v222 = vadd.f32 %v212, %v220
    %v223 = vtanh.pop %v222
    %225 = vrot.lane.b32.xlu0 %v223, 64
    %v226 = vpop.permute.xlu0 %225
    %v228 = vmul.f32 %v211, %v226
    %s229 = scalar_lea.vmem [#allocation2], 2
    %v230 = vld [vmem:[%s229] sm:$0x3]
    %232 = vrot.lane.b32.xlu0 %v228, 32
    %v233 = vpop.permute.xlu0 %232
    %v234 = vsel %vm129, %v233, 0
    %236 = vmatprep.subr.mxu0 0.0
    %237 = vmatpush1.msra.mxu0 0.0
    %238 = vmatprep.subr.mxu0 0.0
    %239 = vmatpush1.msra.mxu0 0.0
    %240 = vmatprep.subr.mxu0 0.0
    %241 = vmatpush1.msra.mxu0 0.0
    %242 = vmatprep.subr.mxu0 0.0
    %243 = vmatpush1.msra.mxu0 0.0
    %244 = vmatprep.subr.mxu0 0.0
    %245 = vmatpush1.msra.mxu0 0.0
    %246 = vmatprep.subr.mxu0 0.0
    %247 = vmatpush1.msra.mxu0 0.0
    %248 = vmatprep.subr.mxu0 0.0
    %249 = vmatpush1.msra.mxu0 0.0
    %250 = vmatprep.subr.mxu0 0.0
    %251 = vmatpush1.msra.mxu0 0.0
    %252 = vmatprep.subr.mxu0 0.0
    %253 = vmatpush1.msra.mxu0 0.0
    %254 = vmatprep.subr.mxu0 0.0
    %255 = vmatpush1.msra.mxu0 0.0
    %256 = vmatprep.subr.mxu0 0.0
    %257 = vmatpush1.msra.mxu0 0.0
    %258 = vmatprep.subr.mxu0 0.0
    %259 = vmatpush1.msra.mxu0 0.0
    %260 = vmatprep.subr.mxu0 0.0
    %261 = vmatpush1.msra.mxu0 %v128
    %262 = vmatprep.subr.mxu0 0.0
    %263 = vmatpush1.msra.mxu0 %v127
    %264 = vmatprep.subr.mxu0 0.0
    %265 = vmatpush1.msra.mxu0 %v126
    %266 = vmatprep.subr.mxu0 0.0
    %267 = vmatpush1.msra.mxu0 %v125
    %268 = vmatprep.subr.mxu0 0.0
    %269 = vmatpush2.msra.mxu0 0.0
    %270 = vmatprep.subr.mxu0 0.0
    %271 = vmatpush2.msra.mxu0 0.0
    %272 = vmatprep.subr.mxu0 0.0
    %273 = vmatpush2.msra.mxu0 0.0
    %274 = vmatprep.subr.mxu0 0.0
    %275 = vmatpush2.msra.mxu0 0.0
    %276 = vmatprep.subr.mxu0 0.0
    %277 = vmatpush2.msra.mxu0 0.0
    %278 = vmatprep.subr.mxu0 0.0
    %279 = vmatpush2.msra.mxu0 0.0
    %280 = vmatprep.subr.mxu0 0.0
    %281 = vmatpush2.msra.mxu0 0.0
    %282 = vmatprep.subr.mxu0 0.0
    %283 = vmatpush2.msra.mxu0 0.0
    %284 = vmatprep.subr.mxu0 0.0
    %285 = vmatpush2.msra.mxu0 0.0
    %286 = vmatprep.subr.mxu0 0.0
    %287 = vmatpush2.msra.mxu0 0.0
    %288 = vmatprep.subr.mxu0 0.0
    %289 = vmatpush2.msra.mxu0 0.0
    %290 = vmatprep.subr.mxu0 0.0
    %291 = vmatpush2.msra.mxu0 0.0
    %292 = vmatprep.subr.mxu0 0.0
    %293 = vmatpush2.msra.mxu0 0.0
    %294 = vmatprep.subr.mxu0 0.0
    %295 = vmatpush2.msra.mxu0 0.0
    %296 = vmatprep.subr.mxu0 0.0
    %297 = vmatpush2.msra.mxu0 0.0
    %298 = vmatprep.subr.mxu0 0.0
    %299 = vmatpush2.msra.mxu0 0.0
    %300 = vmatprep.mubr.f32.mxu0 0.0
    %301 = vmatmul.mubr.f32.gmra.mxu0 %v234
    %v302 = vpop.f32.mrf.mxu0
    %v303 = vadd.f32 0.0, %v302
    %v304 = vpop.f32.mrf.mxu0
    %305 = vdwg.mxu0
    %v306 = vadd.f32 %v230, %v303
    %v307 = vtanh.pop %v306
    %v308 = vxor.u32 %v306, 2147483648
    %v309 = vmul.f32 %v308, 1.442695
    %v310 = vpow.pop %v309
    %v311 = vadd.f32 %v310, 1.0
    %v312 = vrcp.pop %v311
    %v313 = vmul.f32 1.0, %v312
    %v314 = vsel %vm123, %v307, %v313
    %v315 = vmul.f32 %v314, %v222
    %317 = vrot.lane.b32.xlu0 %v314, 64
    %v318 = vpop.permute.xlu0 %317
    %v320 = vmul.f32 %v314, %v318
    %322 = vrot.lane.b32.xlu0 %v320, 32
    %v323 = vpop.permute.xlu0 %322
    %v325 = vadd.f32 %v315, %v323
    %v326 = vtanh.pop %v325
    %328 = vrot.lane.b32.xlu0 %v326, 64
    %v329 = vpop.permute.xlu0 %328
    %v331 = vmul.f32 %v314, %v329
    %s332 = scalar_lea.vmem [#allocation2], 4
    %v333 = vld [vmem:[%s332] sm:$0x3]
    %335 = vrot.lane.b32.xlu0 %v331, 32
    %v336 = vpop.permute.xlu0 %335
    %v337 = vsel %vm129, %v336, 0
    %339 = vmatprep.subr.mxu0 0.0
    %340 = vmatpush1.msra.mxu0 0.0
    %341 = vmatprep.subr.mxu0 0.0
    %342 = vmatpush1.msra.mxu0 0.0
    %343 = vmatprep.subr.mxu0 0.0
    %344 = vmatpush1.msra.mxu0 0.0
    %345 = vmatprep.subr.mxu0 0.0
    %346 = vmatpush1.msra.mxu0 0.0
    %347 = vmatprep.subr.mxu0 0.0
    %348 = vmatpush1.msra.mxu0 0.0
    %349 = vmatprep.subr.mxu0 0.0
    %350 = vmatpush1.msra.mxu0 0.0
    %351 = vmatprep.subr.mxu0 0.0
    %352 = vmatpush1.msra.mxu0 0.0
    %353 = vmatprep.subr.mxu0 0.0
    %354 = vmatpush1.msra.mxu0 0.0
    %355 = vmatprep.subr.mxu0 0.0
    %356 = vmatpush1.msra.mxu0 0.0
    %357 = vmatprep.subr.mxu0 0.0
    %358 = vmatpush1.msra.mxu0 0.0
    %359 = vmatprep.subr.mxu0 0.0
    %360 = vmatpush1.msra.mxu0 0.0
    %361 = vmatprep.subr.mxu0 0.0
    %362 = vmatpush1.msra.mxu0 0.0
    %363 = vmatprep.subr.mxu0 0.0
    %364 = vmatpush1.msra.mxu0 %v128
    %365 = vmatprep.subr.mxu0 0.0
    %366 = vmatpush1.msra.mxu0 %v127
    %367 = vmatprep.subr.mxu0 0.0
    %368 = vmatpush1.msra.mxu0 %v126
    %369 = vmatprep.subr.mxu0 0.0
    %370 = vmatpush1.msra.mxu0 %v125
    %371 = vmatprep.subr.mxu0 0.0
    %372 = vmatpush2.msra.mxu0 0.0
    %373 = vmatprep.subr.mxu0 0.0
    %374 = vmatpush2.msra.mxu0 0.0
    %375 = vmatprep.subr.mxu0 0.0
    %376 = vmatpush2.msra.mxu0 0.0
    %377 = vmatprep.subr.mxu0 0.0
    %378 = vmatpush2.msra.mxu0 0.0
    %379 = vmatprep.subr.mxu0 0.0
    %380 = vmatpush2.msra.mxu0 0.0
    %381 = vmatprep.subr.mxu0 0.0
    %382 = vmatpush2.msra.mxu0 0.0
    %383 = vmatprep.subr.mxu0 0.0
    %384 = vmatpush2.msra.mxu0 0.0
    %385 = vmatprep.subr.mxu0 0.0
    %386 = vmatpush2.msra.mxu0 0.0
    %387 = vmatprep.subr.mxu0 0.0
    %388 = vmatpush2.msra.mxu0 0.0
    %389 = vmatprep.subr.mxu0 0.0
    %390 = vmatpush2.msra.mxu0 0.0
    %391 = vmatprep.subr.mxu0 0.0
    %392 = vmatpush2.msra.mxu0 0.0
    %393 = vmatprep.subr.mxu0 0.0
    %394 = vmatpush2.msra.mxu0 0.0
    %395 = vmatprep.subr.mxu0 0.0
    %396 = vmatpush2.msra.mxu0 0.0
    %397 = vmatprep.subr.mxu0 0.0
    %398 = vmatpush2.msra.mxu0 0.0
    %399 = vmatprep.subr.mxu0 0.0
    %400 = vmatpush2.msra.mxu0 0.0
    %401 = vmatprep.subr.mxu0 0.0
    %402 = vmatpush2.msra.mxu0 0.0
    %403 = vmatprep.mubr.f32.mxu0 0.0
    %404 = vmatmul.mubr.f32.gmra.mxu0 %v337
    %v405 = vpop.f32.mrf.mxu0
    %v406 = vadd.f32 0.0, %v405
    %v407 = vpop.f32.mrf.mxu0
    %408 = vdwg.mxu0
    %v409 = vadd.f32 %v333, %v406
    %v410 = vtanh.pop %v409
    %v411 = vxor.u32 %v409, 2147483648
    %v412 = vmul.f32 %v411, 1.442695
    %v413 = vpow.pop %v412
    %v414 = vadd.f32 %v413, 1.0
    %v415 = vrcp.pop %v414
    %v416 = vmul.f32 1.0, %v415
    %v417 = vsel %vm123, %v410, %v416
    %v418 = vmul.f32 %v417, %v325
    %420 = vrot.lane.b32.xlu0 %v417, 64
    %v421 = vpop.permute.xlu0 %420
    %v423 = vmul.f32 %v417, %v421
    %425 = vrot.lane.b32.xlu0 %v423, 32
    %v426 = vpop.permute.xlu0 %425
    %v428 = vadd.f32 %v418, %v426
    %v429 = vtanh.pop %v428
    %431 = vrot.lane.b32.xlu0 %v429, 64
    %v432 = vpop.permute.xlu0 %431
    %v434 = vmul.f32 %v417, %v432
    %s435 = scalar_lea.vmem [#allocation2], 6
    %v436 = vld [vmem:[%s435] sm:$0x3]
    %438 = vrot.lane.b32.xlu0 %v434, 32
    %v439 = vpop.permute.xlu0 %438
    %v440 = vsel %vm129, %v439, 0
    %442 = vmatprep.subr.mxu0 0.0
    %443 = vmatpush1.msra.mxu0 0.0
    %444 = vmatprep.subr.mxu0 0.0
    %445 = vmatpush1.msra.mxu0 0.0
    %446 = vmatprep.subr.mxu0 0.0
    %447 = vmatpush1.msra.mxu0 0.0
    %448 = vmatprep.subr.mxu0 0.0
    %449 = vmatpush1.msra.mxu0 0.0
    %450 = vmatprep.subr.mxu0 0.0
    %451 = vmatpush1.msra.mxu0 0.0
    %452 = vmatprep.subr.mxu0 0.0
    %453 = vmatpush1.msra.mxu0 0.0
    %454 = vmatprep.subr.mxu0 0.0
    %455 = vmatpush1.msra.mxu0 0.0
    %456 = vmatprep.subr.mxu0 0.0
    %457 = vmatpush1.msra.mxu0 0.0
    %458 = vmatprep.subr.mxu0 0.0
    %459 = vmatpush1.msra.mxu0 0.0
    %460 = vmatprep.subr.mxu0 0.0
    %461 = vmatpush1.msra.mxu0 0.0
    %462 = vmatprep.subr.mxu0 0.0
    %463 = vmatpush1.msra.mxu0 0.0
    %464 = vmatprep.subr.mxu0 0.0
    %465 = vmatpush1.msra.mxu0 0.0
    %466 = vmatprep.subr.mxu0 0.0
    %467 = vmatpush1.msra.mxu0 %v128
    %468 = vmatprep.subr.mxu0 0.0
    %469 = vmatpush1.msra.mxu0 %v127
    %470 = vmatprep.subr.mxu0 0.0
    %471 = vmatpush1.msra.mxu0 %v126
    %472 = vmatprep.subr.mxu0 0.0
    %473 = vmatpush1.msra.mxu0 %v125
    %474 = vmatprep.subr.mxu0 0.0
    %475 = vmatpush2.msra.mxu0 0.0
    %476 = vmatprep.subr.mxu0 0.0
    %477 = vmatpush2.msra.mxu0 0.0
    %478 = vmatprep.subr.mxu0 0.0
    %479 = vmatpush2.msra.mxu0 0.0
    %480 = vmatprep.subr.mxu0 0.0
    %481 = vmatpush2.msra.mxu0 0.0
    %482 = vmatprep.subr.mxu0 0.0
    %483 = vmatpush2.msra.mxu0 0.0
    %484 = vmatprep.subr.mxu0 0.0
    %485 = vmatpush2.msra.mxu0 0.0
    %486 = vmatprep.subr.mxu0 0.0
    %487 = vmatpush2.msra.mxu0 0.0
    %488 = vmatprep.subr.mxu0 0.0
    %489 = vmatpush2.msra.mxu0 0.0
    %490 = vmatprep.subr.mxu0 0.0
    %491 = vmatpush2.msra.mxu0 0.0
    %492 = vmatprep.subr.mxu0 0.0
    %493 = vmatpush2.msra.mxu0 0.0
    %494 = vmatprep.subr.mxu0 0.0
    %495 = vmatpush2.msra.mxu0 0.0
    %496 = vmatprep.subr.mxu0 0.0
    %497 = vmatpush2.msra.mxu0 0.0
    %498 = vmatprep.subr.mxu0 0.0
    %499 = vmatpush2.msra.mxu0 0.0
    %500 = vmatprep.subr.mxu0 0.0
    %501 = vmatpush2.msra.mxu0 0.0
    %502 = vmatprep.subr.mxu0 0.0
    %503 = vmatpush2.msra.mxu0 0.0
    %504 = vmatprep.subr.mxu0 0.0
    %505 = vmatpush2.msra.mxu0 0.0
    %506 = vmatprep.mubr.f32.mxu0 0.0
    %507 = vmatmul.mubr.f32.gmra.mxu0 %v440
    %v508 = vpop.f32.mrf.mxu0
    %v509 = vadd.f32 0.0, %v508
    %v510 = vpop.f32.mrf.mxu0
    %511 = vdwg.mxu0
    %v512 = vadd.f32 %v436, %v509
    %v513 = vtanh.pop %v512
    %v514 = vxor.u32 %v512, 2147483648
    %v515 = vmul.f32 %v514, 1.442695
    %v516 = vpow.pop %v515
    %v517 = vadd.f32 %v516, 1.0
    %v518 = vrcp.pop %v517
    %v519 = vmul.f32 1.0, %v518
    %v520 = vsel %vm123, %v513, %v519
    %v521 = vmul.f32 %v520, %v428
    %523 = vrot.lane.b32.xlu0 %v520, 64
    %v524 = vpop.permute.xlu0 %523
    %v526 = vmul.f32 %v520, %v524
    %528 = vrot.lane.b32.xlu0 %v526, 32
    %v529 = vpop.permute.xlu0 %528
    %v531 = vadd.f32 %v521, %v529
    %v532 = vtanh.pop %v531
    %534 = vrot.lane.b32.xlu0 %v532, 64
    %v535 = vpop.permute.xlu0 %534
    %v537 = vmul.f32 %v520, %v535
    %s538 = scalar_lea.vmem [#allocation2], 8
    %v539 = vld [vmem:[%s538] sm:$0x3]
    %541 = vrot.lane.b32.xlu0 %v537, 32
    %v542 = vpop.permute.xlu0 %541
    %v543 = vsel %vm129, %v542, 0
    %545 = vmatprep.subr.mxu0 0.0
    %546 = vmatpush1.msra.mxu0 0.0
    %547 = vmatprep.subr.mxu0 0.0
    %548 = vmatpush1.msra.mxu0 0.0
    %549 = vmatprep.subr.mxu0 0.0
    %550 = vmatpush1.msra.mxu0 0.0
    %551 = vmatprep.subr.mxu0 0.0
    %552 = vmatpush1.msra.mxu0 0.0
    %553 = vmatprep.subr.mxu0 0.0
    %554 = vmatpush1.msra.mxu0 0.0
    %555 = vmatprep.subr.mxu0 0.0
    %556 = vmatpush1.msra.mxu0 0.0
    %557 = vmatprep.subr.mxu0 0.0
    %558 = vmatpush1.msra.mxu0 0.0
    %559 = vmatprep.subr.mxu0 0.0
    %560 = vmatpush1.msra.mxu0 0.0
    %561 = vmatprep.subr.mxu0 0.0
    %562 = vmatpush1.msra.mxu0 0.0
    %563 = vmatprep.subr.mxu0 0.0
    %564 = vmatpush1.msra.mxu0 0.0
    %565 = vmatprep.subr.mxu0 0.0
    %566 = vmatpush1.msra.mxu0 0.0
    %567 = vmatprep.subr.mxu0 0.0
    %568 = vmatpush1.msra.mxu0 0.0
    %569 = vmatprep.subr.mxu0 0.0
    %570 = vmatpush1.msra.mxu0 %v128
    %571 = vmatprep.subr.mxu0 0.0
    %572 = vmatpush1.msra.mxu0 %v127
    %573 = vmatprep.subr.mxu0 0.0
    %574 = vmatpush1.msra.mxu0 %v126
    %575 = vmatprep.subr.mxu0 0.0
    %576 = vmatpush1.msra.mxu0 %v125
    %577 = vmatprep.subr.mxu0 0.0
    %578 = vmatpush2.msra.mxu0 0.0
    %579 = vmatprep.subr.mxu0 0.0
    %580 = vmatpush2.msra.mxu0 0.0
    %581 = vmatprep.subr.mxu0 0.0
    %582 = vmatpush2.msra.mxu0 0.0
    %583 = vmatprep.subr.mxu0 0.0
    %584 = vmatpush2.msra.mxu0 0.0
    %585 = vmatprep.subr.mxu0 0.0
    %586 = vmatpush2.msra.mxu0 0.0
    %587 = vmatprep.subr.mxu0 0.0
    %588 = vmatpush2.msra.mxu0 0.0
    %589 = vmatprep.subr.mxu0 0.0
    %590 = vmatpush2.msra.mxu0 0.0
    %591 = vmatprep.subr.mxu0 0.0
    %592 = vmatpush2.msra.mxu0 0.0
    %593 = vmatprep.subr.mxu0 0.0
    %594 = vmatpush2.msra.mxu0 0.0
    %595 = vmatprep.subr.mxu0 0.0
    %596 = vmatpush2.msra.mxu0 0.0
    %597 = vmatprep.subr.mxu0 0.0
    %598 = vmatpush2.msra.mxu0 0.0
    %599 = vmatprep.subr.mxu0 0.0
    %600 = vmatpush2.msra.mxu0 0.0
    %601 = vmatprep.subr.mxu0 0.0
    %602 = vmatpush2.msra.mxu0 0.0
    %603 = vmatprep.subr.mxu0 0.0
    %604 = vmatpush2.msra.mxu0 0.0
    %605 = vmatprep.subr.mxu0 0.0
    %606 = vmatpush2.msra.mxu0 0.0
    %607 = vmatprep.subr.mxu0 0.0
    %608 = vmatpush2.msra.mxu0 0.0
    %609 = vmatprep.mubr.f32.mxu0 0.0
    %610 = vmatmul.mubr.f32.gmra.mxu0 %v543
    %v611 = vpop.f32.mrf.mxu0
    %v612 = vadd.f32 0.0, %v611
    %v613 = vpop.f32.mrf.mxu0
    %614 = vdwg.mxu0
    %v615 = vadd.f32 %v539, %v612
    %v616 = vtanh.pop %v615
    %v617 = vxor.u32 %v615, 2147483648
    %v618 = vmul.f32 %v617, 1.442695
    %v619 = vpow.pop %v618
    %v620 = vadd.f32 %v619, 1.0
    %v621 = vrcp.pop %v620
    %v622 = vmul.f32 1.0, %v621
    %v623 = vsel %vm123, %v616, %v622
    %v624 = vmul.f32 %v623, %v531
    %626 = vrot.lane.b32.xlu0 %v623, 64
    %v627 = vpop.permute.xlu0 %626
    %v629 = vmul.f32 %v623, %v627
    %631 = vrot.lane.b32.xlu0 %v629, 32
    %v632 = vpop.permute.xlu0 %631
    %v634 = vadd.f32 %v624, %v632
    %v635 = vtanh.pop %v634
    %637 = vrot.lane.b32.xlu0 %v635, 64
    %v638 = vpop.permute.xlu0 %637
    %v640 = vmul.f32 %v623, %v638
    %s641 = scalar_lea.vmem [#allocation2], 10
    %v642 = vld [vmem:[%s641] sm:$0x3]
    %644 = vrot.lane.b32.xlu0 %v640, 32
    %v645 = vpop.permute.xlu0 %644
    %v646 = vsel %vm129, %v645, 0
    %648 = vmatprep.subr.mxu0 0.0
    %649 = vmatpush1.msra.mxu0 0.0
    %650 = vmatprep.subr.mxu0 0.0
    %651 = vmatpush1.msra.mxu0 0.0
    %652 = vmatprep.subr.mxu0 0.0
    %653 = vmatpush1.msra.mxu0 0.0
    %654 = vmatprep.subr.mxu0 0.0
    %655 = vmatpush1.msra.mxu0 0.0
    %656 = vmatprep.subr.mxu0 0.0
    %657 = vmatpush1.msra.mxu0 0.0
    %658 = vmatprep.subr.mxu0 0.0
    %659 = vmatpush1.msra.mxu0 0.0
    %660 = vmatprep.subr.mxu0 0.0
    %661 = vmatpush1.msra.mxu0 0.0
    %662 = vmatprep.subr.mxu0 0.0
    %663 = vmatpush1.msra.mxu0 0.0
    %664 = vmatprep.subr.mxu0 0.0
    %665 = vmatpush1.msra.mxu0 0.0
    %666 = vmatprep.subr.mxu0 0.0
    %667 = vmatpush1.msra.mxu0 0.0
    %668 = vmatprep.subr.mxu0 0.0
    %669 = vmatpush1.msra.mxu0 0.0
    %670 = vmatprep.subr.mxu0 0.0
    %671 = vmatpush1.msra.mxu0 0.0
    %672 = vmatprep.subr.mxu0 0.0
    %673 = vmatpush1.msra.mxu0 %v128
    %674 = vmatprep.subr.mxu0 0.0
    %675 = vmatpush1.msra.mxu0 %v127
    %676 = vmatprep.subr.mxu0 0.0
    %677 = vmatpush1.msra.mxu0 %v126
    %678 = vmatprep.subr.mxu0 0.0
    %679 = vmatpush1.msra.mxu0 %v125
    %680 = vmatprep.subr.mxu0 0.0
    %681 = vmatpush2.msra.mxu0 0.0
    %682 = vmatprep.subr.mxu0 0.0
    %683 = vmatpush2.msra.mxu0 0.0
    %684 = vmatprep.subr.mxu0 0.0
    %685 = vmatpush2.msra.mxu0 0.0
    %686 = vmatprep.subr.mxu0 0.0
    %687 = vmatpush2.msra.mxu0 0.0
    %688 = vmatprep.subr.mxu0 0.0
    %689 = vmatpush2.msra.mxu0 0.0
    %690 = vmatprep.subr.mxu0 0.0
    %691 = vmatpush2.msra.mxu0 0.0
    %692 = vmatprep.subr.mxu0 0.0
    %693 = vmatpush2.msra.mxu0 0.0
    %694 = vmatprep.subr.mxu0 0.0
    %695 = vmatpush2.msra.mxu0 0.0
    %696 = vmatprep.subr.mxu0 0.0
    %697 = vmatpush2.msra.mxu0 0.0
    %698 = vmatprep.subr.mxu0 0.0
    %699 = vmatpush2.msra.mxu0 0.0
    %700 = vmatprep.subr.mxu0 0.0
    %701 = vmatpush2.msra.mxu0 0.0
    %702 = vmatprep.subr.mxu0 0.0
    %703 = vmatpush2.msra.mxu0 0.0
    %704 = vmatprep.subr.mxu0 0.0
    %705 = vmatpush2.msra.mxu0 0.0
    %706 = vmatprep.subr.mxu0 0.0
    %707 = vmatpush2.msra.mxu0 0.0
    %708 = vmatprep.subr.mxu0 0.0
    %709 = vmatpush2.msra.mxu0 0.0
    %710 = vmatprep.subr.mxu0 0.0
    %711 = vmatpush2.msra.mxu0 0.0
    %712 = vmatprep.mubr.f32.mxu0 0.0
    %713 = vmatmul.mubr.f32.gmra.mxu0 %v646
    %v714 = vpop.f32.mrf.mxu0
    %v715 = vadd.f32 0.0, %v714
    %v716 = vpop.f32.mrf.mxu0
    %717 = vdwg.mxu0
    %v718 = vadd.f32 %v642, %v715
    %v719 = vtanh.pop %v718
    %v720 = vxor.u32 %v718, 2147483648
    %v721 = vmul.f32 %v720, 1.442695
    %v722 = vpow.pop %v721
    %v723 = vadd.f32 %v722, 1.0
    %v724 = vrcp.pop %v723
    %v725 = vmul.f32 1.0, %v724
    %v726 = vsel %vm123, %v719, %v725
    %v727 = vmul.f32 %v726, %v634
    %729 = vrot.lane.b32.xlu0 %v726, 64
    %v730 = vpop.permute.xlu0 %729
    %v732 = vmul.f32 %v726, %v730
    %734 = vrot.lane.b32.xlu0 %v732, 32
    %v735 = vpop.permute.xlu0 %734
    %v737 = vadd.f32 %v727, %v735
    %v738 = vtanh.pop %v737
    %740 = vrot.lane.b32.xlu0 %v738, 64
    %v741 = vpop.permute.xlu0 %740
    %v743 = vmul.f32 %v726, %v741
    %s744 = scalar_lea.vmem [#allocation2], 12
    %v745 = vld [vmem:[%s744] sm:$0x3]
    %747 = vrot.lane.b32.xlu0 %v743, 32
    %v748 = vpop.permute.xlu0 %747
    %v749 = vsel %vm129, %v748, 0
    %751 = vmatprep.subr.mxu0 0.0
    %752 = vmatpush1.msra.mxu0 0.0
    %753 = vmatprep.subr.mxu0 0.0
    %754 = vmatpush1.msra.mxu0 0.0
    %755 = vmatprep.subr.mxu0 0.0
    %756 = vmatpush1.msra.mxu0 0.0
    %757 = vmatprep.subr.mxu0 0.0
    %758 = vmatpush1.msra.mxu0 0.0
    %759 = vmatprep.subr.mxu0 0.0
    %760 = vmatpush1.msra.mxu0 0.0
    %761 = vmatprep.subr.mxu0 0.0
    %762 = vmatpush1.msra.mxu0 0.0
    %763 = vmatprep.subr.mxu0 0.0
    %764 = vmatpush1.msra.mxu0 0.0
    %765 = vmatprep.subr.mxu0 0.0
    %766 = vmatpush1.msra.mxu0 0.0
    %767 = vmatprep.subr.mxu0 0.0
    %768 = vmatpush1.msra.mxu0 0.0
    %769 = vmatprep.subr.mxu0 0.0
    %770 = vmatpush1.msra.mxu0 0.0
    %771 = vmatprep.subr.mxu0 0.0
    %772 = vmatpush1.msra.mxu0 0.0
    %773 = vmatprep.subr.mxu0 0.0
    %774 = vmatpush1.msra.mxu0 0.0
    %775 = vmatprep.subr.mxu0 0.0
    %776 = vmatpush1.msra.mxu0 %v128
    %777 = vmatprep.subr.mxu0 0.0
    %778 = vmatpush1.msra.mxu0 %v127
    %779 = vmatprep.subr.mxu0 0.0
    %780 = vmatpush1.msra.mxu0 %v126
    %781 = vmatprep.subr.mxu0 0.0
    %782 = vmatpush1.msra.mxu0 %v125
    %783 = vmatprep.subr.mxu0 0.0
    %784 = vmatpush2.msra.mxu0 0.0
    %785 = vmatprep.subr.mxu0 0.0
    %786 = vmatpush2.msra.mxu0 0.0
    %787 = vmatprep.subr.mxu0 0.0
    %788 = vmatpush2.msra.mxu0 0.0
    %789 = vmatprep.subr.mxu0 0.0
    %790 = vmatpush2.msra.mxu0 0.0
    %791 = vmatprep.subr.mxu0 0.0
    %792 = vmatpush2.msra.mxu0 0.0
    %793 = vmatprep.subr.mxu0 0.0
    %794 = vmatpush2.msra.mxu0 0.0
    %795 = vmatprep.subr.mxu0 0.0
    %796 = vmatpush2.msra.mxu0 0.0
    %797 = vmatprep.subr.mxu0 0.0
    %798 = vmatpush2.msra.mxu0 0.0
    %799 = vmatprep.subr.mxu0 0.0
    %800 = vmatpush2.msra.mxu0 0.0
    %801 = vmatprep.subr.mxu0 0.0
    %802 = vmatpush2.msra.mxu0 0.0
    %803 = vmatprep.subr.mxu0 0.0
    %804 = vmatpush2.msra.mxu0 0.0
    %805 = vmatprep.subr.mxu0 0.0
    %806 = vmatpush2.msra.mxu0 0.0
    %807 = vmatprep.subr.mxu0 0.0
    %808 = vmatpush2.msra.mxu0 0.0
    %809 = vmatprep.subr.mxu0 0.0
    %810 = vmatpush2.msra.mxu0 0.0
    %811 = vmatprep.subr.mxu0 0.0
    %812 = vmatpush2.msra.mxu0 0.0
    %813 = vmatprep.subr.mxu0 0.0
    %814 = vmatpush2.msra.mxu0 0.0
    %815 = vmatprep.mubr.f32.mxu0 0.0
    %816 = vmatmul.mubr.f32.gmra.mxu0 %v749
    %v817 = vpop.f32.mrf.mxu0
    %v818 = vadd.f32 0.0, %v817
    %v819 = vpop.f32.mrf.mxu0
    %820 = vdwg.mxu0
    %v821 = vadd.f32 %v745, %v818
    %v822 = vtanh.pop %v821
    %v823 = vxor.u32 %v821, 2147483648
    %v824 = vmul.f32 %v823, 1.442695
    %v825 = vpow.pop %v824
    %v826 = vadd.f32 %v825, 1.0
    %v827 = vrcp.pop %v826
    %v828 = vmul.f32 1.0, %v827
    %v829 = vsel %vm123, %v822, %v828
    %v830 = vmul.f32 %v829, %v737
    %832 = vrot.lane.b32.xlu0 %v829, 64
    %v833 = vpop.permute.xlu0 %832
    %v835 = vmul.f32 %v829, %v833
    %837 = vrot.lane.b32.xlu0 %v835, 32
    %v838 = vpop.permute.xlu0 %837
    %v840 = vadd.f32 %v830, %v838
    %v841 = vtanh.pop %v840
    %843 = vrot.lane.b32.xlu0 %v841, 64
    %v844 = vpop.permute.xlu0 %843
    %v846 = vmul.f32 %v829, %v844
    %s847 = scalar_lea.vmem [#allocation2], 14
    %v848 = vld [vmem:[%s847] sm:$0x3]
    %850 = vrot.lane.b32.xlu0 %v846, 32
    %v851 = vpop.permute.xlu0 %850
    %v852 = vsel %vm129, %v851, 0
    %854 = vmatprep.subr.mxu0 0.0
    %855 = vmatpush1.msra.mxu0 0.0
    %856 = vmatprep.subr.mxu0 0.0
    %857 = vmatpush1.msra.mxu0 0.0
    %858 = vmatprep.subr.mxu0 0.0
    %859 = vmatpush1.msra.mxu0 0.0
    %860 = vmatprep.subr.mxu0 0.0
    %861 = vmatpush1.msra.mxu0 0.0
    %862 = vmatprep.subr.mxu0 0.0
    %863 = vmatpush1.msra.mxu0 0.0
    %864 = vmatprep.subr.mxu0 0.0
    %865 = vmatpush1.msra.mxu0 0.0
    %866 = vmatprep.subr.mxu0 0.0
    %867 = vmatpush1.msra.mxu0 0.0
    %868 = vmatprep.subr.mxu0 0.0
    %869 = vmatpush1.msra.mxu0 0.0
    %870 = vmatprep.subr.mxu0 0.0
    %871 = vmatpush1.msra.mxu0 0.0
    %872 = vmatprep.subr.mxu0 0.0
    %873 = vmatpush1.msra.mxu0 0.0
    %874 = vmatprep.subr.mxu0 0.0
    %875 = vmatpush1.msra.mxu0 0.0
    %876 = vmatprep.subr.mxu0 0.0
    %877 = vmatpush1.msra.mxu0 0.0
    %878 = vmatprep.subr.mxu0 0.0
    %879 = vmatpush1.msra.mxu0 %v128
    %880 = vmatprep.subr.mxu0 0.0
    %881 = vmatpush1.msra.mxu0 %v127
    %882 = vmatprep.subr.mxu0 0.0
    %883 = vmatpush1.msra.mxu0 %v126
    %884 = vmatprep.subr.mxu0 0.0
    %885 = vmatpush1.msra.mxu0 %v125
    %886 = vmatprep.subr.mxu0 0.0
    %887 = vmatpush2.msra.mxu0 0.0
    %888 = vmatprep.subr.mxu0 0.0
    %889 = vmatpush2.msra.mxu0 0.0
    %890 = vmatprep.subr.mxu0 0.0
    %891 = vmatpush2.msra.mxu0 0.0
    %892 = vmatprep.subr.mxu0 0.0
    %893 = vmatpush2.msra.mxu0 0.0
    %894 = vmatprep.subr.mxu0 0.0
    %895 = vmatpush2.msra.mxu0 0.0
    %896 = vmatprep.subr.mxu0 0.0
    %897 = vmatpush2.msra.mxu0 0.0
    %898 = vmatprep.subr.mxu0 0.0
    %899 = vmatpush2.msra.mxu0 0.0
    %900 = vmatprep.subr.mxu0 0.0
    %901 = vmatpush2.msra.mxu0 0.0
    %902 = vmatprep.subr.mxu0 0.0
    %903 = vmatpush2.msra.mxu0 0.0
    %904 = vmatprep.subr.mxu0 0.0
    %905 = vmatpush2.msra.mxu0 0.0
    %906 = vmatprep.subr.mxu0 0.0
    %907 = vmatpush2.msra.mxu0 0.0
    %908 = vmatprep.subr.mxu0 0.0
    %909 = vmatpush2.msra.mxu0 0.0
    %910 = vmatprep.subr.mxu0 0.0
    %911 = vmatpush2.msra.mxu0 0.0
    %912 = vmatprep.subr.mxu0 0.0
    %913 = vmatpush2.msra.mxu0 0.0
    %914 = vmatprep.subr.mxu0 0.0
    %915 = vmatpush2.msra.mxu0 0.0
    %916 = vmatprep.subr.mxu0 0.0
    %917 = vmatpush2.msra.mxu0 0.0
    %918 = vmatprep.mubr.f32.mxu0 0.0
    %919 = vmatmul.mubr.f32.gmra.mxu0 %v852
    %v920 = vpop.f32.mrf.mxu0
    %v921 = vadd.f32 0.0, %v920
    %v922 = vpop.f32.mrf.mxu0
    %923 = vdwg.mxu0
    %v924 = vadd.f32 %v848, %v921
    %v925 = vtanh.pop %v924
    %v926 = vxor.u32 %v924, 2147483648
    %v927 = vmul.f32 %v926, 1.442695
    %v928 = vpow.pop %v927
    %v929 = vadd.f32 %v928, 1.0
    %v930 = vrcp.pop %v929
    %v931 = vmul.f32 1.0, %v930
    %v932 = vsel %vm123, %v925, %v931
    %v933 = vmul.f32 %v932, %v840
    %935 = vrot.lane.b32.xlu0 %v932, 64
    %v936 = vpop.permute.xlu0 %935
    %v938 = vmul.f32 %v932, %v936
    %940 = vrot.lane.b32.xlu0 %v938, 32
    %v941 = vpop.permute.xlu0 %940
    %v943 = vadd.f32 %v933, %v941
    %v944 = vtanh.pop %v943
    %946 = vrot.lane.b32.xlu0 %v944, 64
    %v947 = vpop.permute.xlu0 %946
    %v949 = vmul.f32 %v932, %v947
    %v950 = vld [vmem:[%s4] sm:$0xff]
    %v951 = vld [vmem:[%s4 + $0x8] sm:$0xff]
    %v952 = vld [vmem:[%s4 + $0x10] sm:$0xff]
    %v953 = vld [vmem:[%s4 + $0x18] sm:$0xff]
    %v954 = vld [vmem:[%s5] sm:$0x1]
    %v956 = vlaneseq
    %v957 = vshrl.u32 %v956, 7
    %v958 = vsub.s32 0, %v957
    %v959 = vrot.slane %v954, %v958
    %962 = vrot.lane.b32.xlu0 %v949, 32
    %v963 = vpop.permute.xlu0 %962
    %v964 = vsel %vm129, %v963, 0
    %966 = vmatprep.subr.mxu0 0.0
    %967 = vmatpush1.msra.mxu0 0.0
    %968 = vmatprep.subr.mxu0 0.0
    %969 = vmatpush1.msra.mxu0 0.0
    %970 = vmatprep.subr.mxu0 0.0
    %971 = vmatpush1.msra.mxu0 0.0
    %972 = vmatprep.subr.mxu0 0.0
    %973 = vmatpush1.msra.mxu0 0.0
    %974 = vmatprep.subr.mxu0 0.0
    %975 = vmatpush1.msra.mxu0 0.0
    %976 = vmatprep.subr.mxu0 0.0
    %977 = vmatpush1.msra.mxu0 0.0
    %978 = vmatprep.subr.mxu0 0.0
    %979 = vmatpush1.msra.mxu0 0.0
    %980 = vmatprep.subr.mxu0 0.0
    %981 = vmatpush1.msra.mxu0 0.0
    %982 = vmatprep.subr.mxu0 0.0
    %983 = vmatpush1.msra.mxu0 0.0
    %984 = vmatprep.subr.mxu0 0.0
    %985 = vmatpush1.msra.mxu0 0.0
    %986 = vmatprep.subr.mxu0 0.0
    %987 = vmatpush1.msra.mxu0 0.0
    %988 = vmatprep.subr.mxu0 0.0
    %989 = vmatpush1.msra.mxu0 0.0
    %990 = vmatprep.subr.mxu0 0.0
    %991 = vmatpush1.msra.mxu0 %v953
    %992 = vmatprep.subr.mxu0 0.0
    %993 = vmatpush1.msra.mxu0 %v952
    %994 = vmatprep.subr.mxu0 0.0
    %995 = vmatpush1.msra.mxu0 %v951
    %996 = vmatprep.subr.mxu0 0.0
    %997 = vmatpush1.msra.mxu0 %v950
    %998 = vmatprep.subr.mxu0 0.0
    %999 = vmatpush2.msra.mxu0 0.0
    %1000 = vmatprep.subr.mxu0 0.0
    %1001 = vmatpush2.msra.mxu0 0.0
    %1002 = vmatprep.subr.mxu0 0.0
    %1003 = vmatpush2.msra.mxu0 0.0
    %1004 = vmatprep.subr.mxu0 0.0
    %1005 = vmatpush2.msra.mxu0 0.0
    %1006 = vmatprep.subr.mxu0 0.0
    %1007 = vmatpush2.msra.mxu0 0.0
    %1008 = vmatprep.subr.mxu0 0.0
    %1009 = vmatpush2.msra.mxu0 0.0
    %1010 = vmatprep.subr.mxu0 0.0
    %1011 = vmatpush2.msra.mxu0 0.0
    %1012 = vmatprep.subr.mxu0 0.0
    %1013 = vmatpush2.msra.mxu0 0.0
    %1014 = vmatprep.subr.mxu0 0.0
    %1015 = vmatpush2.msra.mxu0 0.0
    %1016 = vmatprep.subr.mxu0 0.0
    %1017 = vmatpush2.msra.mxu0 0.0
    %1018 = vmatprep.subr.mxu0 0.0
    %1019 = vmatpush2.msra.mxu0 0.0
    %1020 = vmatprep.subr.mxu0 0.0
    %1021 = vmatpush2.msra.mxu0 0.0
    %1022 = vmatprep.subr.mxu0 0.0
    %1023 = vmatpush2.msra.mxu0 0.0
    %1024 = vmatprep.subr.mxu0 0.0
    %1025 = vmatpush2.msra.mxu0 0.0
    %1026 = vmatprep.subr.mxu0 0.0
    %1027 = vmatpush2.msra.mxu0 0.0
    %1028 = vmatprep.subr.mxu0 0.0
    %1029 = vmatpush2.msra.mxu0 0.0
    %1030 = vmatprep.mubr.f32.mxu0 0.0
    %1031 = vmatmul.mubr.f32.gmra.mxu0 %v964
    %v1032 = vpop.f32.mrf.mxu0
    %v1033 = vadd.f32 %v959, %v1032
    %v1034 = vpop.f32.mrf.mxu0
    %1035 = vdwg.mxu0
    %vm1036 = vcmask 25600
    %1037 = vst.msk [vmem:[#allocation3] sm:$0x3] %vm1036, %v1033
    // Predicated region
    $region26: #{lstm_model_forward.1} parent=1 // pred_check
      _
    $region27: #{lstm_model_forward.1} parent=1 // pred_check_branch
      %1039 = sbr.rel (0) target = $region29
    $region28: #{lstm_model_forward.1} parent=1 // pred_region
      %s1041 = ssub.s32 32, 32
      %1042 = vsyncadd [#allocation4], %s1041
      %s1044 = sshll.u32 [#allocation3], 4
      %s1045 = int_to_ptr.vmem [resolvable:$true] %s1044
      %1047 = dma.vmem_to_hbm [thread:$0]  %s1045, 32, %s6, [#allocation4]
    $region29: #{lstm_model_forward.1} parent=1 // pred_fallthru
      _
    // Predicated region
    $region30: #{lstm_model_forward.1} parent=1 // pred_check
      _
    $region31: #{lstm_model_forward.1} parent=1 // pred_check_branch
      %1049 = sbr.rel (0) target = $region33
    $region32: #{lstm_model_forward.1} parent=1 // pred_region
      %1050 = dma.done [#allocation4], 32
    $region33: #{lstm_model_forward.1} parent=1 // pred_fallthru
      _
    %1051 = vsyncpa [#allocation4], 1

</llo_original>
